<compile_context>
chip_gen: v7x
topology: tpu7x:2x2x1
jax: 0.10.0
libtpu: 0.0.40
codegen_flags: <defaults>
</compile_context>

<pallas_src>
import jax
import jax.numpy as jnp
from jax.experimental import pallas as pl
from jax.experimental.pallas import tpu as pltpu
import numpy as np


def _patch_embed_kernel(x_ref, w_ref, add_ref, cls_ref, o_ref):
    # x_ref  : (1, Np, K)   bf16  one batch element's patches
    # w_ref  : (K, E)       bf16  conv weight, reshaped + transposed
    # add_ref: (Np, E)      f32   positional_embedding[1:, :] + conv bias (pre-folded)
    # cls_ref: (1, E)       f32   class_embedding + positional_embedding[0, :]
    # o_ref  : (1, Np+1, E) f32
    x = x_ref[0]                                                       # (Np, K)
    acc = jnp.dot(x, w_ref[...], preferred_element_type=jnp.float32)  # MXU, f32 acc
    body = acc + add_ref[...]                                          # (Np, E)
    full = jnp.concatenate([cls_ref[...], body], axis=0)               # (Np+1, E)
    o_ref[0] = full.astype(o_ref.dtype)


def patch_embedding_forward(x, conv_w, conv_b, class_emb, pos_emb, patch_size):
    """x: (B, C, H, W) float32 (NCHW, like PyTorch). Returns (B, num_patches+1, E) f32."""
    B, C, H, W = x.shape
    P = patch_size
    Hp, Wp = H // P, W // P
    Np = Hp * Wp
    E = conv_w.shape[0]
    K = C * P * P

    # --- glue: unfold into patches, (B, Np, K), feature order = (c, kh, kw) ---
    # TODO(synk): for large images, fuse this unfold into the kernel's DMA pattern
    # (grid over (B, Hp) with the (c,kh,kw) flatten done in VMEM) to avoid the
    # standalone XLA transpose copy in HBM.
    patches = x.reshape(B, C, Hp, P, Wp, P)
    patches = patches.transpose(0, 2, 4, 1, 3, 5).reshape(B, Np, K)
    patches = patches.astype(jnp.bfloat16)                  # bf16 MXU operands

    w2d = conv_w.reshape(E, K).T.astype(jnp.bfloat16)       # (K, E) bf16
    # Fold conv bias into the (patch-token) positional embedding: one less operand.
    add = (pos_emb[0, 1:, :] + conv_b[None, :]).astype(jnp.float32)        # (Np, E)
    # Class-token row folded with its positional row, emitted by the kernel.
    cls = (class_emb[0, 0, :] + pos_emb[0, 0, :]).reshape(1, E).astype(jnp.float32)

    out = pl.pallas_call(
        _patch_embed_kernel,
        out_shape=jax.ShapeDtypeStruct((B, Np + 1, E), jnp.float32),
        grid=(B,),
        in_specs=[
            pl.BlockSpec((1, Np, K), lambda b: (b, 0, 0)),
            pl.BlockSpec((K, E), lambda b: (0, 0)),       # grid-invariant operands:
            pl.BlockSpec((Np, E), lambda b: (0, 0)),      # constant index_map, DMA'd once
            pl.BlockSpec((1, E), lambda b: (0, 0)),
        ],
        out_specs=pl.BlockSpec((1, Np + 1, E), lambda b: (b, 0, 0)),
        compiler_params=pltpu.CompilerParams(
            dimension_semantics=("parallel",),
            vmem_limit_bytes=64 * 1024 * 1024,            # explicit; <= physical on v5e/v6e/v7x
        ),
    )(patches, w2d, add, cls)

    # TODO(synk): embedding_dropout=0.1 is identity in eval mode; a training-mode
    # dropout would use pltpu.prng_seed + pltpu.stateful_bernoulli in-kernel.
    # TODO(synk): for very high-resolution configs on v7x (64 MiB VMEM), add an
    # Np tile axis to the grid (block (1, tnp, K), tnp a multiple of 8) instead
    # of whole-(Np, K) per-batch blocks, and mark it "parallel" for both TCs.
    return out


def _reference(x, conv_w, conv_b, class_emb, pos_emb, patch_size):
    """Pure-JAX f32 reference mirroring the PyTorch forward (eval mode)."""
    B = x.shape[0]
    E = conv_w.shape[0]
    y = jax.lax.conv_general_dilated(
        x, conv_w, window_strides=(patch_size, patch_size), padding="VALID",
        dimension_numbers=("NCHW", "OIHW", "NCHW"))          # (B, E, Hp, Wp)
    y = y.reshape(B, E, -1).transpose(0, 2, 1)               # (B, Np, E)
    y = y + conv_b.reshape(1, 1, E)
    cls = jnp.broadcast_to(class_emb, (B, 1, E))
    y = jnp.concatenate([cls, y], axis=1)
    return y + pos_emb


if __name__ == "__main__":
    # Small, self-consistent shapes: in_channels=4, embed_dims=32, patch_size=4,
    # image_size=16 -> num_patches = (16//4)**2 = 16, seq_len = 17.
    B, C, H, W = 2, 4, 16, 16
    P, E = 4, 32
    Np = (H // P) * (W // P)

    key = jax.random.PRNGKey(0)
    k_x, k_w, k_b, k_cls, k_pos = jax.random.split(key, 5)

    x = jax.random.normal(k_x, (B, C, H, W), dtype=jnp.float32)
    conv_w = jax.random.normal(k_w, (E, C, P, P), dtype=jnp.float32) * 0.02
    conv_b = jax.random.normal(k_b, (E,), dtype=jnp.float32) * 0.02
    class_emb = jax.random.normal(k_cls, (1, 1, E), dtype=jnp.float32)
    pos_emb = jax.random.normal(k_pos, (1, Np + 1, E), dtype=jnp.float32)

    out = patch_embedding_forward(x, conv_w, conv_b, class_emb, pos_emb, P)
    out = jax.block_until_ready(out)

    ref = _reference(x, conv_w, conv_b, class_emb, pos_emb, P)
    # bf16 matmul operands with f32 accumulation vs. f32 reference conv:
    # tolerance sized for bf16 input rounding (outputs are O(1)).
    np.testing.assert_allclose(np.asarray(out), np.asarray(ref), rtol=2e-2, atol=2e-2)
    assert out.shape == (B, Np + 1, E)
    print("KERNEL_OK")
</pallas_src>

<mosaic_0001>
module attributes {stable_mosaic.version = 11 : i64} {
  func.func @_patch_embed_kernel(%arg0: i32, %arg1: memref<1x16x64xbf16, #tpu.memory_space<vmem>>, %arg2: memref<64x32xbf16, #tpu.memory_space<vmem>>, %arg3: memref<16x32xf32, #tpu.memory_space<vmem>>, %arg4: memref<1x32xf32, #tpu.memory_space<vmem>>, %arg5: memref<1x17x32xf32, #tpu.memory_space<vmem>>) attributes {dimension_semantics = [#tpu.dimension_semantics<parallel>], iteration_bounds = array<i64: 2>, scalar_prefetch = 0 : i64, scratch_operands = 0 : i64, tpu.core_type = #tpu.core_type<tc>, window_params = [{transform_indices = @transform_0, window_bounds = array<i64: 1, 16, 64>}, {pipeline_mode = #tpu.pipeline_mode<synchronous>, transform_indices = @transform_1, window_bounds = array<i64: 64, 32>}, {pipeline_mode = #tpu.pipeline_mode<synchronous>, transform_indices = @transform_2, window_bounds = array<i64: 16, 32>}, {pipeline_mode = #tpu.pipeline_mode<synchronous>, transform_indices = @transform_3, window_bounds = array<i64: 1, 32>}, {transform_indices = @transform_4, window_bounds = array<i64: 1, 17, 32>}]} {
    %c0 = arith.constant 0 : index
    %c0_0 = arith.constant 0 : index
    %c0_1 = arith.constant 0 : index
    %0 = vector.load %arg1[%c0, %c0_0, %c0_1] : memref<1x16x64xbf16, #tpu.memory_space<vmem>>, vector<1x16x64xbf16>
    %1 = vector.shape_cast %0 : vector<1x16x64xbf16> to vector<16x64xbf16>
    %c0_2 = arith.constant 0 : index
    %c0_3 = arith.constant 0 : index
    %2 = vector.load %arg2[%c0_2, %c0_3] : memref<64x32xbf16, #tpu.memory_space<vmem>>, vector<64x32xbf16>
    %cst = arith.constant dense<0.000000e+00> : vector<16x32xf32>
    %3 = tpu.matmul %1, %2, %cst {dimension_numbers = #tpu.dot_dimension_numbers<[1], [0], [0], [1], [0, 0, 1, 1], [], []>} : vector<16x64xbf16>, vector<64x32xbf16>, vector<16x32xf32> -> vector<16x32xf32>
    %c0_4 = arith.constant 0 : index
    %c0_5 = arith.constant 0 : index
    %4 = vector.load %arg3[%c0_4, %c0_5] : memref<16x32xf32, #tpu.memory_space<vmem>>, vector<16x32xf32>
    %5 = arith.addf %3, %4 : vector<16x32xf32>
    %c0_6 = arith.constant 0 : index
    %c0_7 = arith.constant 0 : index
    %6 = vector.load %arg4[%c0_6, %c0_7] : memref<1x32xf32, #tpu.memory_space<vmem>>, vector<1x32xf32>
    %7 = tpu.concatenate %6, %5 in 0 : vector<1x32xf32>, vector<16x32xf32> -> vector<17x32xf32>
    %c0_8 = arith.constant 0 : index
    %c0_9 = arith.constant 0 : index
    %c0_10 = arith.constant 0 : index
    %8 = vector.load %arg5[%c0_8, %c0_9, %c0_10] : memref<1x17x32xf32, #tpu.memory_space<vmem>>, vector<1x17x32xf32>
    %9 = vector.shape_cast %8 : vector<1x17x32xf32> to vector<17x32xf32>
    %10 = vector.shape_cast %7 : vector<17x32xf32> to vector<1x17x32xf32>
    tpu.vector_store %arg5[%c0_8, %c0_9, %c0_10], %10 {strides = array<i32>} : memref<1x17x32xf32, #tpu.memory_space<vmem>>, vector<1x17x32xf32>,
    return
  }
  func.func @transform_0(%arg0: i32) -> (i32, i32, i32) {
    %c0_i32 = arith.constant 0 : i32
    %c0_i32_0 = arith.constant 0 : i32
    %c0_i32_1 = arith.constant 0 : i32
    return %arg0, %c0_i32, %c0_i32_0 : i32, i32, i32
  }
  func.func @transform_1(%arg0: i32) -> (i32, i32) {
    %c0_i32 = arith.constant 0 : i32
    %c0_i32_0 = arith.constant 0 : i32
    %c0_i32_1 = arith.constant 0 : i32
    return %c0_i32, %c0_i32_0 : i32, i32
  }
  func.func @transform_2(%arg0: i32) -> (i32, i32) {
    %c0_i32 = arith.constant 0 : i32
    %c0_i32_0 = arith.constant 0 : i32
    %c0_i32_1 = arith.constant 0 : i32
    return %c0_i32, %c0_i32_0 : i32, i32
  }
  func.func @transform_3(%arg0: i32) -> (i32, i32) {
    %c0_i32 = arith.constant 0 : i32
    %c0_i32_0 = arith.constant 0 : i32
    %c0_i32_1 = arith.constant 0 : i32
    return %c0_i32, %c0_i32_0 : i32, i32
  }
  func.func @transform_4(%arg0: i32) -> (i32, i32, i32) {
    %c0_i32 = arith.constant 0 : i32
    %c0_i32_0 = arith.constant 0 : i32
    %c0_i32_1 = arith.constant 0 : i32
    return %arg0, %c0_i32, %c0_i32_0 : i32, i32, i32
  }
}

</mosaic_0001>

<llo_original>
// kernel: tpu_custom_call.1
$region0: #{tpu_custom_call.1}
  #allocation0 [shape = 'u32[]', space=smem, size = 0x4, offset = 0x4, fixed_abs, tag = 'smem constant byte address 0x4 - core index']
  #allocation1 [shape = 'u32[144,128]{1,0:T(1,128)}', space=vmem, size = 0x12000, scoped, tag = 'internal scratch']
  %s0 = inlined_call_operand.hbm [shape: bf16[2,16,64], index: 0, kind: input, shape index: {}]
  %s1 = inlined_call_operand.hbm [shape: bf16[64,32], index: 1, kind: input, shape index: {}]
  %s2 = inlined_call_operand.hbm [shape: f32[16,32], index: 2, kind: input, shape index: {}]
  %s3 = inlined_call_operand.hbm [shape: f32[1,32], index: 3, kind: input, shape index: {}]
  %s4 = inlined_call_operand.hbm [shape: f32[2,17,32], index: 4, kind: output, shape index: {}]
  %s5 = sld [smem:[#allocation0]]
  $region65: #{tpu_custom_call.1} parent=0
    _
  %s7 = ssub.s32 1, %s5
  %s8 = scalar_select 0, %s7, %s5
  $region1: #{tpu_custom_call.1} parent=0
    #allocation2 [shape = 'u8[8192]{0}', space=vmem, size = 0x2000, scoped, tag = 'input window, operand 0']
    #allocation3 [shape = 's32[2]{0}', space=sflag, size = 0x8, scoped, tag = 'scoped memory for tpu_custom_call.1']
    #allocation4 [shape = 's32[2]{0}', space=sflag, size = 0x8, scoped, tag = 'scoped memory for tpu_custom_call.1']
    #allocation5 [shape = 'u8[16384]{0}', space=vmem, size = 0x4000, scoped, tag = 'input window, operand 1, single buffered']
    #allocation6 [shape = 's32[1]{0}', space=sflag, size = 0x4, scoped, tag = 'scoped memory for tpu_custom_call.1']
    #allocation7 [shape = 'u8[8192]{0}', space=vmem, size = 0x2000, scoped, tag = 'input window, operand 2, single buffered']
    #allocation8 [shape = 'u8[512]{0}', space=vmem, size = 0x400, scoped, tag = 'input window, operand 3, single buffered']
    #allocation9 [shape = 's32[1]{0}', space=sflag, size = 0x4, scoped, tag = 'scoped memory for tpu_custom_call.1']
    #allocation10 [shape = 'u8[24576]{0}', space=vmem, size = 0x6000, scoped, tag = 'output window, operand 0']
    %9 = vsyncpa [#allocation3], 0
    %s10 = scalar_lea.sflag [#allocation3], 1
    %11 = vsyncpa %s10, 0
    %12 = vsyncpa [#allocation6], 0
    %13 = vsyncpa [#allocation9], 0
    %14 = vsyncpa [#allocation4], 0
    %s15 = scalar_lea.sflag [#allocation4], 1
    %16 = vsyncpa %s15, 0
    loop: start=0, step=1, limit=4
    $region2: #{tpu_custom_call.1} parent=1 // loop_pre_header
      _
    $region3: #{tpu_custom_call.1} parent=1 // loop_header
      %s18 = sphi 0, %s22
      %p19 = scmp.ge.s32.totalorder %s18, 4
      %s28 = sphi 0, %s30
      %s31 = sphi 0, %s28
      %s32 = sphi 0, %s31
      %s48 = sphi 0, %s32
      %s52 = sphi 0, %s52
      %s54 = sphi 0, %s52
      %s55 = sphi 0, %s54
      %s69 = sphi 0, %s55
      %s73 = sphi 0, %s73
      %s75 = sphi 0, %s73
      %s76 = sphi 0, %s75
      %s90 = sphi 0, %s76
      %s94 = sphi 0, %s94
      %s96 = sphi 0, %s94
      %s97 = sphi 0, %s96
      %s111 = sphi 0, %s97
      %s117 = sphi 0, %s119
      %s120 = sphi 0, %s117
      %s121 = sphi 0, %s120
      %s137 = sphi 0, %s121
    $region4: #{tpu_custom_call.1} parent=1 // loop_header_branch
      %21 = sbr.rel (%p19) target = $region8
    $region5: #{tpu_custom_call.1} parent=1 // loop_body
      %s23 = ssub.s32 %s18, 1
      %s24 = ssub.s32 %s18, 2
      %s25 = sadd.s32 %s18, 1
      %s26 = ssub.s32 %s18, %s25
      %p27 = scmp.eq.s32.totalorder %s26, 0
      %s29 = sadd.s32 %s28, 1
      %s30 = scalar_select %p27, %s28, %s29
      %p33 = pneg %p27
      %p34 = scmp.eq.s32.totalorder %s18, 1
      %p35 = por %p33, %p34
      %p36 = scmp.ne.s32.totalorder %s28, %s31
      %p37 = scmp.eq.s32.totalorder %s18, 0
      %p38 = por %p36, %p37
      %p39 = scmp.ne.s32.totalorder %s28, %s31
      %p40 = scmp.eq.s32.totalorder %s23, 1
      %p41 = por %p39, %p40
      %p42 = scmp.ne.s32.totalorder %s31, %s32
      %p43 = scmp.eq.s32.totalorder %s23, 0
      %p44 = por %p42, %p43
      %p45 = scmp.ne.s32.totalorder %s31, %s32
      %p46 = scmp.eq.s32.totalorder %s24, 1
      %p47 = por %p45, %p46
      %p49 = scmp.ne.s32.totalorder %s32, %s48
      %p50 = scmp.eq.s32.totalorder %s24, 0
      %p51 = por %p49, %p50
      %s53 = sadd.s32 %s52, 1
      %p56 = scmp.eq.s32.totalorder %s18, 1
      %p57 = scmp.ne.s32.totalorder %s52, %s54
      %p58 = scmp.eq.s32.totalorder %s18, 0
      %p59 = por %p57, %p58
      %p60 = scmp.ne.s32.totalorder %s52, %s54
      %p61 = scmp.eq.s32.totalorder %s23, 1
      %p62 = por %p60, %p61
      %p63 = scmp.ne.s32.totalorder %s54, %s55
      %p64 = scmp.eq.s32.totalorder %s23, 0
      %p65 = por %p63, %p64
      %p66 = scmp.ne.s32.totalorder %s54, %s55
      %p67 = scmp.eq.s32.totalorder %s24, 1
      %p68 = por %p66, %p67
      %p70 = scmp.ne.s32.totalorder %s55, %s69
      %p71 = scmp.eq.s32.totalorder %s24, 0
      %p72 = por %p70, %p71
      %s74 = sadd.s32 %s73, 1
      %p77 = scmp.eq.s32.totalorder %s18, 1
      %p78 = scmp.ne.s32.totalorder %s73, %s75
      %p79 = scmp.eq.s32.totalorder %s18, 0
      %p80 = por %p78, %p79
      %p81 = scmp.ne.s32.totalorder %s73, %s75
      %p82 = scmp.eq.s32.totalorder %s23, 1
      %p83 = por %p81, %p82
      %p84 = scmp.ne.s32.totalorder %s75, %s76
      %p85 = scmp.eq.s32.totalorder %s23, 0
      %p86 = por %p84, %p85
      %p87 = scmp.ne.s32.totalorder %s75, %s76
      %p88 = scmp.eq.s32.totalorder %s24, 1
      %p89 = por %p87, %p88
      %p91 = scmp.ne.s32.totalorder %s76, %s90
      %p92 = scmp.eq.s32.totalorder %s24, 0
      %p93 = por %p91, %p92
      %s95 = sadd.s32 %s94, 1
      %p98 = scmp.eq.s32.totalorder %s18, 1
      %p99 = scmp.ne.s32.totalorder %s94, %s96
      %p100 = scmp.eq.s32.totalorder %s18, 0
      %p101 = por %p99, %p100
      %p102 = scmp.ne.s32.totalorder %s94, %s96
      %p103 = scmp.eq.s32.totalorder %s23, 1
      %p104 = por %p102, %p103
      %p105 = scmp.ne.s32.totalorder %s96, %s97
      %p106 = scmp.eq.s32.totalorder %s23, 0
      %p107 = por %p105, %p106
      %p108 = scmp.ne.s32.totalorder %s96, %s97
      %p109 = scmp.eq.s32.totalorder %s24, 1
      %p110 = por %p108, %p109
      %p112 = scmp.ne.s32.totalorder %s97, %s111
      %p113 = scmp.eq.s32.totalorder %s24, 0
      %p114 = por %p112, %p113
      %s115 = ssub.s32 %s18, %s25
      %p116 = scmp.eq.s32.totalorder %s115, 0
      %s118 = sadd.s32 %s117, 1
      %s119 = scalar_select %p116, %s117, %s118
      %p122 = pneg %p116
      %p123 = scmp.eq.s32.totalorder %s18, 1
      %p124 = por %p122, %p123
      %p125 = scmp.ne.s32.totalorder %s117, %s120
      %p126 = scmp.eq.s32.totalorder %s18, 0
      %p127 = por %p125, %p126
      %p128 = scmp.ne.s32.totalorder %s117, %s120
      %p129 = scmp.eq.s32.totalorder %s23, 1
      %p130 = por %p128, %p129
      %p131 = scmp.ne.s32.totalorder %s120, %s121
      %p132 = scmp.eq.s32.totalorder %s23, 0
      %p133 = por %p131, %p132
      %p134 = scmp.ne.s32.totalorder %s120, %s121
      %p135 = scmp.eq.s32.totalorder %s24, 1
      %p136 = por %p134, %p135
      %p138 = scmp.ne.s32.totalorder %s121, %s137
      %p139 = scmp.eq.s32.totalorder %s24, 0
      %p140 = por %p138, %p139
      %p141 = scmp.le.s32.totalorder 1, %s18
      %p142 = scmp.lt.s32.totalorder %s18, 3
      %p143 = pnand %p141, %p142
      %p144 = pneg %p143
      // Predicated region
      $region9: #{tpu_custom_call.1} parent=5 // pred_check
        _
      $region10: #{tpu_custom_call.1} parent=5 // pred_check_branch
        %146 = sbr.rel (%p143) target = $region12
      $region11: #{tpu_custom_call.1} parent=5 // pred_region
        %s147 = ssub.s32 %s18, 1
        // Predicated region
        $region13: #{tpu_custom_call.1} parent=11 // pred_check
          %p148 = pneg %p65
        $region14: #{tpu_custom_call.1} parent=11 // pred_check_branch
          %150 = sbr.rel (%p148) target = $region16
        $region15: #{tpu_custom_call.1} parent=11 // pred_region
          %s152 = ssub.s32 512, 512
          %153 = vsyncadd [#allocation6], %s152
          %s154 = sshll.u32 [#allocation5], 4
          %s155 = int_to_ptr.vmem [resolvable:$true] %s154
          %160 = dma.hbm_to_vmem [thread:$0]  %s1, 512, %s155, [#allocation6], 64, 64, 4
        $region16: #{tpu_custom_call.1} parent=11 // pred_fallthru
          _
        // Predicated region
        $region17: #{tpu_custom_call.1} parent=11 // pred_check
          %p161 = pneg %p86
        $region18: #{tpu_custom_call.1} parent=11 // pred_check_branch
          %163 = sbr.rel (%p161) target = $region20
        $region19: #{tpu_custom_call.1} parent=11 // pred_region
          %s165 = ssub.s32 256, 256
          %166 = vsyncadd [#allocation6], %s165
          %s167 = sshll.u32 [#allocation7], 4
          %s168 = int_to_ptr.vmem [resolvable:$true] %s167
          %173 = dma.hbm_to_vmem [thread:$0]  %s2, 256, %s168, [#allocation6], 128, 128, 8
        $region20: #{tpu_custom_call.1} parent=11 // pred_fallthru
          _
        // Predicated region
        $region21: #{tpu_custom_call.1} parent=11 // pred_check
          %p174 = pneg %p107
        $region22: #{tpu_custom_call.1} parent=11 // pred_check_branch
          %176 = sbr.rel (%p174) target = $region24
        $region23: #{tpu_custom_call.1} parent=11 // pred_region
          %s178 = ssub.s32 16, 16
          %179 = vsyncadd [#allocation9], %s178
          %s181 = sshll.u32 [#allocation8], 4
          %s182 = int_to_ptr.vmem [resolvable:$true] %s181
          %184 = dma.hbm_to_vmem [thread:$0]  %s3, 16, %s182, [#allocation9]
        $region24: #{tpu_custom_call.1} parent=11 // pred_fallthru
          _
      $region12: #{tpu_custom_call.1} parent=5 // pred_fallthru
        _
      %p185 = scmp.lt.s32.totalorder %s18, 2
      // Predicated region
      $region25: #{tpu_custom_call.1} parent=5 // pred_check
        %p186 = pneg %p185
      $region26: #{tpu_custom_call.1} parent=5 // pred_check_branch
        %188 = sbr.rel (%p186) target = $region28
      $region27: #{tpu_custom_call.1} parent=5 // pred_region
        // Predicated region
        $region29: #{tpu_custom_call.1} parent=27 // pred_check
          %p189 = pneg %p38
        $region30: #{tpu_custom_call.1} parent=27 // pred_check_branch
          %191 = sbr.rel (%p189) target = $region32
        $region31: #{tpu_custom_call.1} parent=27 // pred_region
          %s192 = sand.u32 %s28, 1
          %s193 = scalar_lea.sflag [#allocation3], %s192
          %s194 = sand.u32 %s28, 1
          %s195 = smul.addr %s194, 8
          %s196 = scalar_lea.vmem [#allocation2], %s195
          %s198 = ssub.s32 128, 128
          %199 = vsyncadd %s193, %s198
          %s200 = smul.addr %s18, 2
          %s201 = smul.addr %s200, 64
          %s202 = scalar_lea.hbm %s0, %s201
          %s203 = sshll.u32 %s196, 4
          %s204 = int_to_ptr.vmem [resolvable:$true] %s203
          %209 = dma.hbm_to_vmem [thread:$0]  %s202, 128, %s204, %s193, 64, 64, 4
        $region32: #{tpu_custom_call.1} parent=27 // pred_fallthru
          _
      $region28: #{tpu_custom_call.1} parent=5 // pred_fallthru
        _
      %p210 = scmp.le.s32.totalorder 1, %s18
      %p211 = scmp.lt.s32.totalorder %s18, 3
      %p212 = pnand %p210, %p211
      %p213 = pneg %p212
      // Predicated region
      $region33: #{tpu_custom_call.1} parent=5 // pred_check
        _
      $region34: #{tpu_custom_call.1} parent=5 // pred_check_branch
        %215 = sbr.rel (%p212) target = $region36
      $region35: #{tpu_custom_call.1} parent=5 // pred_region
        %s216 = ssub.s32 %s18, 1
        %s217 = sand.u32 %s31, 1
        %s218 = scalar_lea.sflag [#allocation3], %s217
        %s219 = sand.u32 %s31, 1
        %s220 = smul.addr %s219, 8
        %s221 = scalar_lea.vmem [#allocation2], %s220
        // Predicated region
        $region37: #{tpu_custom_call.1} parent=35 // pred_check
          %p222 = pneg %p44
        $region38: #{tpu_custom_call.1} parent=35 // pred_check_branch
          %224 = sbr.rel (%p222) target = $region40
        $region39: #{tpu_custom_call.1} parent=35 // pred_region
          %225 = dma.done %s218, 128
        $region40: #{tpu_custom_call.1} parent=35 // pred_fallthru
          _
        // Predicated region
        $region41: #{tpu_custom_call.1} parent=35 // pred_check
          %p226 = pneg %p65
        $region42: #{tpu_custom_call.1} parent=35 // pred_check_branch
          %228 = sbr.rel (%p226) target = $region44
        $region43: #{tpu_custom_call.1} parent=35 // pred_region
          %229 = dma.done [#allocation6], 512
        $region44: #{tpu_custom_call.1} parent=35 // pred_fallthru
          _
        // Predicated region
        $region45: #{tpu_custom_call.1} parent=35 // pred_check
          %p230 = pneg %p86
        $region46: #{tpu_custom_call.1} parent=35 // pred_check_branch
          %232 = sbr.rel (%p230) target = $region48
        $region47: #{tpu_custom_call.1} parent=35 // pred_region
          %233 = dma.done [#allocation6], 256
        $region48: #{tpu_custom_call.1} parent=35 // pred_fallthru
          _
        // Predicated region
        $region49: #{tpu_custom_call.1} parent=35 // pred_check
          %p234 = pneg %p107
        $region50: #{tpu_custom_call.1} parent=35 // pred_check_branch
          %236 = sbr.rel (%p234) target = $region52
        $region51: #{tpu_custom_call.1} parent=35 // pred_region
          %237 = dma.done [#allocation9], 16
        $region52: #{tpu_custom_call.1} parent=35 // pred_fallthru
          _
        %s238 = sand.u32 %s31, 1
        %s239 = scalar_lea.sflag [#allocation3], %s238
        %s240 = sand.u32 %s31, 1
        %s241 = smul.addr %s240, 8
        %s242 = scalar_lea.vmem [#allocation2], %s241
        %p243 = pneg %p44
        %p244 = pneg %p41
        %p245 = pneg %p65
        %p246 = pneg %p62
        %p247 = pneg %p86
        %p248 = pneg %p83
        %p249 = pneg %p107
        %p250 = pneg %p104
        %p251 = pneg %p133
        %p252 = pneg %p130
        %s253 = sand.u32 %s120, 1
        %s254 = scalar_lea.sflag [#allocation4], %s253
        %s255 = sand.u32 %s120, 1
        %s256 = smul.addr %s255, 24
        %s257 = scalar_lea.vmem [#allocation10], %s256
        %v259 = vld [vmem:[%s221] sm:$0xf]
        %v260 = vld [vmem:[%s221 + $0x4] sm:$0xf]
        %v261 = vld [vmem:[#allocation5] sm:$0xf]
        %v262 = vld [vmem:[#allocation5 + $0x4] sm:$0xf]
        %v263 = vld [vmem:[#allocation5 + $0x8] sm:$0xf]
        %v264 = vld [vmem:[#allocation5 + $0xc] sm:$0xf]
        %v265 = vld [vmem:[#allocation5 + $0x10] sm:$0xf]
        %v266 = vld [vmem:[#allocation5 + $0x14] sm:$0xf]
        %v267 = vld [vmem:[#allocation5 + $0x18] sm:$0xf]
        %v268 = vld [vmem:[#allocation5 + $0x1c] sm:$0xf]
        %v269 = vld [vmem:[#allocation7] sm:$0xff]
        %v270 = vld [vmem:[#allocation7 + $0x8] sm:$0xff]
        %v273 = vunpack.c.l.b16 %v259
        %v274 = vunpack.c.l.b16 %v260
        %v275 = vpack.c.b16 %v274, %v273
        %v284 = vunpack.c.l.b16 %v261
        %v285 = vunpack.c.l.b16 %v262
        %v286 = vunpack.c.l.b16 %v263
        %v287 = vunpack.c.l.b16 %v264
        %v288 = vunpack.c.l.b16 %v265
        %v289 = vunpack.c.l.b16 %v266
        %v290 = vunpack.c.l.b16 %v267
        %v291 = vunpack.c.l.b16 %v268
        %v292 = vpack.c.b16 %v285, %v284
        %v293 = vpack.c.b16 %v287, %v286
        %v294 = vpack.c.b16 %v289, %v288
        %v295 = vpack.c.b16 %v291, %v290
        %vm300 = vcmask 523264
        %v302 = vsel %vm300, %v275, 0
        %304 = vmatprep.subr.bf16.mxu0 0
        %305 = vmatpush1.bf16.msra.mxu0 %v292
        %306 = vmatprep.subr.bf16.mxu0 0
        %307 = vmatpush1.bf16.msra.mxu0 %v293
        %308 = vmatprep.subr.bf16.mxu0 0
        %309 = vmatpush1.bf16.msra.mxu0 %v294
        %310 = vmatprep.subr.bf16.mxu0 0
        %311 = vmatpush1.bf16.msra.mxu0 %v295
        %312 = vmatprep.subr.bf16.mxu0 0
        %313 = vmatpush1.bf16.msra.mxu0 0
        %314 = vmatprep.subr.bf16.mxu0 0
        %315 = vmatpush1.bf16.msra.mxu0 0
        %316 = vmatprep.subr.bf16.mxu0 0
        %317 = vmatpush1.bf16.msra.mxu0 0
        %318 = vmatprep.subr.bf16.mxu0 0
        %319 = vmatpush1.bf16.msra.mxu0 0
        %320 = vmatprep.subr.bf16.mxu0 0
        %321 = vmatpush1.bf16.msra.mxu0 0
        %322 = vmatprep.subr.bf16.mxu0 0
        %323 = vmatpush1.bf16.msra.mxu0 0
        %324 = vmatprep.subr.bf16.mxu0 0
        %325 = vmatpush1.bf16.msra.mxu0 0
        %326 = vmatprep.subr.bf16.mxu0 0
        %327 = vmatpush1.bf16.msra.mxu0 0
        %328 = vmatprep.subr.bf16.mxu0 0
        %329 = vmatpush1.bf16.msra.mxu0 0
        %330 = vmatprep.subr.bf16.mxu0 0
        %331 = vmatpush1.bf16.msra.mxu0 0
        %332 = vmatprep.subr.bf16.mxu0 0
        %333 = vmatpush1.bf16.msra.mxu0 0
        %334 = vmatprep.subr.bf16.mxu0 0
        %335 = vmatpush1.bf16.msra.mxu0 0
        %336 = vmatprep.mubr.bf16.mxu0 0
        %337 = vmatmul.mubr.bf16.gmra.mrb[0].mxu0 %v302
        %v338 = vpop.f32.mrb[0].mxu0
        %v339 = vadd.f32 %v269, %v338
        %v340 = vpop.f32.mrb[0].mxu0
        %v341 = vpop.f32.mrb[0].mxu0
        %v342 = vadd.f32 %v270, %v341
        %v343 = vpop.f32.mrb[0].mxu0
        %344 = vdwg.mxu0
        %v345 = vld [vmem:[#allocation8] sm:$0x1]
        %vm348 = vcmask 1040384
        %v349 = vrot.slane %v339, 7
        %v350 = vrot.slane %v342, 7
        %v351 = vsel %vm348, %v349, %v350
        %v355 = vsel %vm348, %v345, %v349
        %vm356 = vcmask 261120
        %357 = vst.msk [vmem:[%s257] sm:$0xff] %vm356, %v355
        %358 = vst.msk [vmem:[%s257 + $0x8] sm:$0xff] %vm356, %v351
        %vm359 = vcmask 253952
        %360 = vst.msk [vmem:[%s257 + $0x10] sm:$0x1] %vm359, %v350
        %s361 = sand.u32 %s120, 1
        %s362 = scalar_lea.sflag [#allocation4], %s361
        %s363 = sand.u32 %s120, 1
        %s364 = smul.addr %s363, 24
        %s365 = scalar_lea.vmem [#allocation10], %s364
        // Predicated region
        $region53: #{tpu_custom_call.1} parent=35 // pred_check
          %p366 = pneg %p130
        $region54: #{tpu_custom_call.1} parent=35 // pred_check_branch
          %368 = sbr.rel (%p366) target = $region56
        $region55: #{tpu_custom_call.1} parent=35 // pred_region
          %s370 = ssub.s32 384, 384
          %371 = vsyncadd %s362, %s370
          %s372 = smul.addr %s23, 3
          %s373 = smul.addr %s372, 128
          %s374 = scalar_lea.hbm %s4, %s373
          %s375 = sshll.u32 %s365, 4
          %s376 = int_to_ptr.vmem [resolvable:$true] %s375
          %381 = dma.vmem_to_hbm [thread:$0]  %s376, 384, %s374, %s362, 128, 128, 8
        $region56: #{tpu_custom_call.1} parent=35 // pred_fallthru
          _
      $region36: #{tpu_custom_call.1} parent=5 // pred_fallthru
        _
      %p382 = scmp.le.s32.totalorder 2, %s18
      // Predicated region
      $region57: #{tpu_custom_call.1} parent=5 // pred_check
        %p383 = pneg %p382
      $region58: #{tpu_custom_call.1} parent=5 // pred_check_branch
        %385 = sbr.rel (%p383) target = $region60
      $region59: #{tpu_custom_call.1} parent=5 // pred_region
        %s386 = ssub.s32 %s18, 2
        // Predicated region
        $region61: #{tpu_custom_call.1} parent=59 // pred_check
          %p387 = pneg %p136
        $region62: #{tpu_custom_call.1} parent=59 // pred_check_branch
          %389 = sbr.rel (%p387) target = $region64
        $region63: #{tpu_custom_call.1} parent=59 // pred_region
          %s390 = sand.u32 %s121, 1
          %s391 = scalar_lea.sflag [#allocation4], %s390
          %s392 = sand.u32 %s121, 1
          %s393 = smul.addr %s392, 24
          %s394 = scalar_lea.vmem [#allocation10], %s393
          %395 = dma.done %s391, 384
        $region64: #{tpu_custom_call.1} parent=59 // pred_fallthru
          _
      $region60: #{tpu_custom_call.1} parent=5 // pred_fallthru
        _
    $region6: #{tpu_custom_call.1} parent=1 // loop_footer
      %s22 = sadd.s32 1, %s18
    $region7: #{tpu_custom_call.1} parent=1 // loop_footer_branch
      %17 = sbr.rel target = $region3
    $region8: #{tpu_custom_call.1} parent=1 // loop_exit
      _
    %396 = vsyncpa [#allocation3], 1
    %s397 = scalar_lea.sflag [#allocation3], 1
    %398 = vsyncpa %s397, 1
    %399 = vsyncpa [#allocation6], 1
    %400 = vsyncpa [#allocation9], 1
    %401 = vsyncpa [#allocation4], 1
    %s402 = scalar_lea.sflag [#allocation4], 1
    %403 = vsyncpa %s402, 1

</llo_original>
